<compile_context>
chip_gen: v7x
topology: tpu7x:2x2x1
jax: 0.10.0
libtpu: 0.0.40
codegen_flags: <defaults>
</compile_context>

<pallas_src>
import jax
import jax.numpy as jnp
from jax import lax
from jax.experimental import pallas as pl
from jax.experimental.pallas import tpu as pltpu


# ------------------------------ small helpers -------------------------------

def _round_up(x, m):
    return ((x + m - 1) // m) * m


def _pad_gate_rows(w, h, hp):
    """(4h, C) -> (4hp, C): each PyTorch gate block [i,f,g,o] placed at g*hp."""
    parts = []
    for g in range(4):
        parts.append(jnp.pad(w[g * h:(g + 1) * h], ((0, hp - h), (0, 0))))
    return jnp.concatenate(parts, axis=0)


def _pad_col_groups(w, groups):
    """(R, sum(real)) -> (R, sum(pad)); groups = [(real, pad), ...]."""
    parts, off = [], 0
    for r, p in groups:
        parts.append(jnp.pad(w[:, off:off + r], ((0, 0), (0, p - r))))
        off += r
    return jnp.concatenate(parts, axis=1)


# ------------------------------ tiled linear --------------------------------

def _linear_kernel(x_ref, wt_ref, b_ref, o_ref):
    o_ref[...] = (jnp.dot(x_ref[...], wt_ref[...],
                          preferred_element_type=jnp.float32)
                  + b_ref[...]).astype(o_ref.dtype)


def linear_tiled(x, wt, b2, *, tm=256):
    """y = x @ wt + b2.  x: (N, Din), wt: (Din, Dout), b2: (1, Dout).
    Din/Dout are assumed lane-padded (multiples of 128) by the caller."""
    n, din = x.shape
    dout = wt.shape[1]
    tm = min(tm, _round_up(n, 8))
    n_pad = _round_up(n, tm)
    if n_pad != n:
        x = jnp.pad(x, ((0, n_pad - n), (0, 0)))
    y = pl.pallas_call(
        _linear_kernel,
        out_shape=jax.ShapeDtypeStruct((n_pad, dout), jnp.float32),
        grid=(n_pad // tm,),
        in_specs=[
            pl.BlockSpec((tm, din), lambda i: (i, 0)),
            pl.BlockSpec((din, dout), lambda i: (0, 0)),
            pl.BlockSpec((1, dout), lambda i: (0, 0)),
        ],
        out_specs=pl.BlockSpec((tm, dout), lambda i: (i, 0)),
        compiler_params=pltpu.CompilerParams(
            dimension_semantics=("parallel",),
            vmem_limit_bytes=48 * 1024 * 1024),
    )(x, wt, b2)
    return y[:n]


# --------------------------- fused LSTM recurrence ---------------------------

def _make_lstm_kernel(hp, tb):
    def kernel(x_ref, m_ref, w_ref, b_ref, out_ref, h_scr, c_scr):
        d = pl.program_id(0)          # direction: 0 = fwd, 1 = bwd
        ib = pl.program_id(1)         # time block index

        @pl.when(ib == 0)
        def _():
            h_scr[...] = jnp.zeros_like(h_scr)
            c_scr[...] = jnp.zeros_like(c_scr)

        w = w_ref[...]                # (Din_p + Hp, 4Hp) resident
        b = b_ref[...]                # (1, 4Hp)

        def step(s, carry):
            # local time index (reversed within the block for the bwd dir)
            se = s * (1 - 2 * d) + d * (tb - 1)
            x_t = x_ref[se]           # (Bp, Din_p)
            m_t = m_ref[se]           # (Bp, 1)
            h_prev = h_scr[...]
            xh = jnp.concatenate([x_t, h_prev], axis=-1)     # (Bp, Din_p+Hp)
            gates = jnp.dot(xh, w, preferred_element_type=jnp.float32) + b
            i_g = jax.nn.sigmoid(gates[:, 0 * hp:1 * hp])
            f_g = jax.nn.sigmoid(gates[:, 1 * hp:2 * hp])
            g_g = jnp.tanh(gates[:, 2 * hp:3 * hp])
            o_g = jax.nn.sigmoid(gates[:, 3 * hp:4 * hp])
            c_new = f_g * c_scr[...] + i_g * g_g
            h_new = o_g * jnp.tanh(c_new)
            c_scr[...] = m_t * c_new + (1.0 - m_t) * c_scr[...]
            h_scr[...] = m_t * h_new + (1.0 - m_t) * h_scr[...]
            # packed-sequence semantics: padded positions emit zeros
            out_ref[se] = (h_new * m_t).astype(out_ref.dtype)
            return carry

        lax.fori_loop(0, tb, step, 0, unroll=True)
    return kernel


def lstm_layer(x_tm, mask_tm, w_stack, b_stack, *, hp, tb):
    """One (possibly bidirectional) LSTM layer.
      x_tm:    (Tp, Bp, Din_p)  time-major, zero-padded
      mask_tm: (Tp, Bp, 1)      float mask
      w_stack: (nd, Din_p+Hp, 4Hp)   fused [W_ih^T; W_hh^T] per direction
      b_stack: (nd, 1, 4Hp)          b_ih + b_hh (gate-padded)
    returns (Tp, Bp, nd*Hp): fwd/bwd lane-concatenated hidden states."""
    tp, bp, dinp = x_tm.shape
    nd = w_stack.shape[0]
    nb = tp // tb

    def time_idx(d, i):
        return i * (1 - 2 * d) + d * (nb - 1)   # fwd: i,  bwd: nb-1-i

    return pl.pallas_call(
        _make_lstm_kernel(hp, tb),
        out_shape=jax.ShapeDtypeStruct((tp, bp, nd * hp), jnp.float32),
        grid=(nd, nb),
        in_specs=[
            pl.BlockSpec((tb, bp, dinp), lambda d, i: (time_idx(d, i), 0, 0)),
            pl.BlockSpec((tb, bp, 1), lambda d, i: (time_idx(d, i), 0, 0)),
            pl.BlockSpec((None, dinp + hp, 4 * hp), lambda d, i: (d, 0, 0)),
            pl.BlockSpec((None, 1, 4 * hp), lambda d, i: (d, 0, 0)),
        ],
        out_specs=pl.BlockSpec((tb, bp, hp), lambda d, i: (time_idx(d, i), 0, d)),
        scratch_shapes=[pltpu.VMEM((bp, hp), jnp.float32),
                        pltpu.VMEM((bp, hp), jnp.float32)],
        compiler_params=pltpu.CompilerParams(
            dimension_semantics=("parallel", "arbitrary")),
    )(x_tm, mask_tm, w_stack, b_stack)


# ------------------------- CRF forward log-normalizer ------------------------

def _make_crf_kernel(tb):
    def kernel(emis_ref, mask_ref, transT_ref, start_ref, end_ref, out_ref,
               alpha_scr):
        ib = pl.program_id(0)

        @pl.when(ib == 0)
        def _():
            alpha_scr[...] = jnp.zeros_like(alpha_scr)

        transT = transT_ref[...]                         # (Kp, Kp)

        def step(s, carry):
            t = ib * tb + s
            e = emis_ref[s]                              # (Bp, Kp)
            m = mask_ref[s]                              # (Bp, 1)
            alpha = alpha_scr[...]                       # (Bp, Kp)
            # s[b, j, i] = alpha[b, i] + trans[i, j]; reduce over lanes (i)
            sarr = alpha[:, None, :] + transT[None, :, :]    # (Bp, Kp, Kp)
            mx = jnp.max(sarr, axis=-1, keepdims=True)
            lse = mx[..., 0] + jnp.log(
                jnp.sum(jnp.exp(sarr - mx), axis=-1))
            nxt = lse + e
            init = start_ref[...] + e
            upd = m * nxt + (1.0 - m) * alpha
            alpha_scr[...] = jnp.where(t == 0, init, upd)
            return carry

        lax.fori_loop(0, tb, step, 0)

        @pl.when(ib == pl.num_programs(0) - 1)
        def _():
            fin = alpha_scr[...] + end_ref[...]
            mxf = jnp.max(fin, axis=-1, keepdims=True)
            out_ref[...] = mxf + jnp.log(
                jnp.sum(jnp.exp(fin - mxf), axis=-1, keepdims=True))
    return kernel


def crf_log_normalizer(emis_tm, mask_tm, transitions, start_trans, end_trans,
                       *, tb):
    """torchcrf _compute_normalizer on padded (Tp, Bp, Kp) emissions -> (Bp,)."""
    tp, bp, kp = emis_tm.shape
    nb = tp // tb
    out = pl.pallas_call(
        _make_crf_kernel(tb),
        out_shape=jax.ShapeDtypeStruct((bp, 1), jnp.float32),
        grid=(nb,),
        in_specs=[
            pl.BlockSpec((tb, bp, kp), lambda i: (i, 0, 0)),
            pl.BlockSpec((tb, bp, 1), lambda i: (i, 0, 0)),
            pl.BlockSpec((kp, kp), lambda i: (0, 0)),
            pl.BlockSpec((1, kp), lambda i: (0, 0)),
            pl.BlockSpec((1, kp), lambda i: (0, 0)),
        ],
        out_specs=pl.BlockSpec((bp, 1), lambda i: (0, 0)),
        scratch_shapes=[pltpu.VMEM((bp, kp), jnp.float32)],
        compiler_params=pltpu.CompilerParams(
            dimension_semantics=("arbitrary",)),
    )(emis_tm, mask_tm, jnp.transpose(transitions),
      start_trans.reshape(1, kp), end_trans.reshape(1, kp))
    return out[:, 0]


# ------------------------------ JAX glue ops --------------------------------

def crf_sequence_score(emissions, tags, mask, transitions, start_trans,
                       end_trans, lengths):
    """torchcrf _compute_score (gold-path score)."""
    # TODO(synk): tag-indexed gathers have no clean Pallas form; done in JAX.
    bsz = emissions.shape[0]
    barange = jnp.arange(bsz)
    emis_tag = jnp.take_along_axis(emissions, tags[:, :, None], axis=2)[:, :, 0]
    score = start_trans[tags[:, 0]] + emis_tag[:, 0]
    trans_score = transitions[tags[:, :-1], tags[:, 1:]]
    score = score + jnp.sum((trans_score + emis_tag[:, 1:]) * mask[:, 1:],
                            axis=1)
    last_tags = tags[barange, lengths - 1]
    return score + end_trans[last_tags]


def crf_viterbi_decode(emissions, mask, transitions, start_trans, end_trans,
                       lengths):
    """torchcrf _viterbi_decode, vectorized; returns (B, T) int32 (0-padded)."""
    # TODO(synk): Viterbi backtrack is data-dependent sequential indexing; kept in JAX.
    bsz, t_len, k = emissions.shape
    barange = jnp.arange(bsz)
    score0 = start_trans[None, :] + emissions[:, 0]          # (B, K)

    def fwd(score, xs):
        e_t, m_t = xs
        bc = score[:, :, None] + transitions[None, :, :]     # (B, Kprev, Knext)
        best_prev = jnp.argmax(bc, axis=1)                   # (B, Knext)
        best_score = jnp.max(bc, axis=1) + e_t
        new_score = jnp.where(m_t[:, None] > 0, best_score, score)
        return new_score, best_prev

    e_rest = jnp.transpose(emissions[:, 1:], (1, 0, 2))
    m_rest = jnp.transpose(mask[:, 1:], (1, 0))
    final_score, history = lax.scan(fwd, score0, (e_rest, m_rest))
    final_score = final_score + end_trans[None, :]
    last_tag = jnp.argmax(final_score, axis=-1).astype(jnp.int32)

    hist_shift = jnp.concatenate(
        [history, jnp.zeros((1, bsz, k), dtype=history.dtype)], axis=0)

    def back(cur, xs):
        t, h = xs
        from_hist = h[barange, cur].astype(jnp.int32)
        cur_new = jnp.where(t == lengths - 1, last_tag,
                            jnp.where(t < lengths - 1, from_hist, cur))
        out = jnp.where(t < lengths, cur_new, 0)
        return cur_new, out

    _, preds_tm = lax.scan(back, jnp.zeros((bsz,), jnp.int32),
                           (jnp.arange(t_len), hist_shift), reverse=True)
    return jnp.transpose(preds_tm, (1, 0)).astype(jnp.int32)


# -------------------------------- the model ---------------------------------

class LSTMCRFPallas:
    """Pallas reimplementation of LSTM_CRF.forward (inference/loss path)."""

    TIME_BLOCK = 8          # timesteps processed per grid step
    NEG = -1e30             # "minus infinity" for padded CRF tags (not -inf!)

    def __init__(self, hyperparameters, task2labels, feature2dim, key):
        self.hidden = hyperparameters['hidden_dim']
        self.num_layers = hyperparameters['num_layers']
        self.bidir = hyperparameters['bidir']
        self.finetune = hyperparameters['fine_tune_embs']
        self.emb_dim = feature2dim['word_embs']
        self.num_dirs = 2 if self.bidir else 1
        self.time_block = self.TIME_BLOCK
        # 'dropout' not in hyperparameters -> use_dropout is False (matches module)

        self.hidden_p = _round_up(self.hidden, 128)      # lane-padded hidden
        self.emb_dim_p = _round_up(self.emb_dim, 128)    # lane-padded emb dim
        hp, dp = self.hidden_p, self.emb_dim_p

        def uni(k, shape, bound):
            return jax.random.uniform(k, shape, jnp.float32, -bound, bound)

        keys = iter(jax.random.split(key, 256))

        # embedding fine-tune layer (padded, zero-filled)
        if self.finetune:
            bd = 1.0 / jnp.sqrt(self.emb_dim)
            w = uni(next(keys), (self.emb_dim, self.emb_dim), bd)
            b = uni(next(keys), (self.emb_dim,), bd)
            wt_p = jnp.zeros((dp, dp), jnp.float32)
            wt_p = wt_p.at[:self.emb_dim, :self.emb_dim].set(jnp.transpose(w))
            b_p = jnp.zeros((1, dp), jnp.float32).at[0, :self.emb_dim].set(b)
            self.emb2emb_p = (wt_p, b_p)

        # LSTM parameters: per layer, stacked over directions, fused [W_ih^T; W_hh^T]
        bd = 1.0 / jnp.sqrt(self.hidden)
        self.lstm_p = []
        for layer in range(self.num_layers):
            if layer == 0:
                in_groups = [(self.emb_dim, dp)]
            else:
                in_groups = [(self.hidden, hp)] * self.num_dirs
            in_dim = sum(g[0] for g in in_groups)
            w_list, b_list = [], []
            for _ in range(self.num_dirs):
                w_ih = uni(next(keys), (4 * self.hidden, in_dim), bd)
                w_hh = uni(next(keys), (4 * self.hidden, self.hidden), bd)
                b_ih = uni(next(keys), (4 * self.hidden,), bd)
                b_hh = uni(next(keys), (4 * self.hidden,), bd)
                w_ih_p = _pad_gate_rows(_pad_col_groups(w_ih, in_groups),
                                        self.hidden, hp)
                w_hh_p = _pad_gate_rows(
                    jnp.pad(w_hh, ((0, 0), (0, hp - self.hidden))),
                    self.hidden, hp)
                b_p = _pad_gate_rows((b_ih + b_hh)[:, None],
                                     self.hidden, hp)[:, 0]
                w_cat = jnp.concatenate(
                    [jnp.transpose(w_ih_p), jnp.transpose(w_hh_p)], axis=0)
                w_list.append(w_cat)
                b_list.append(b_p.reshape(1, 4 * hp))
            self.lstm_p.append((jnp.stack(w_list, axis=0),
                                jnp.stack(b_list, axis=0)))

        # task heads (fused into one matmul) + CRF params (real + padded)
        out_in = self.hidden * self.num_dirs
        out_groups = [(self.hidden, hp)] * self.num_dirs
        self.tasks = list(task2labels.keys())
        self.task_num_tags = {}
        self.task_num_tags_p = {}
        self.crf_params = {}
        self.crf_params_p = {}
        head_wt_blocks, head_b_blocks = [], []
        for task, labels in task2labels.items():
            k_tags = len(labels)
            kp = _round_up(k_tags, 128)
            self.task_num_tags[task] = k_tags
            self.task_num_tags_p[task] = kp

            bdo = 1.0 / jnp.sqrt(out_in)
            w = uni(next(keys), (k_tags, out_in), bdo)
            b = uni(next(keys), (k_tags,), bdo)
            w_p = jnp.pad(_pad_col_groups(w, out_groups),
                          ((0, kp - k_tags), (0, 0)))
            b_p = jnp.pad(b, (0, kp - k_tags))
            head_wt_blocks.append(jnp.transpose(w_p))          # (nd*hp, kp)
            head_b_blocks.append(b_p)

            start_t = uni(next(keys), (k_tags,), 0.1)
            end_t = uni(next(keys), (k_tags,), 0.1)
            trans = uni(next(keys), (k_tags, k_tags), 0.1)
            self.crf_params[task] = (start_t, end_t, trans)
            self.crf_params_p[task] = (
                jnp.full((kp,), self.NEG, jnp.float32).at[:k_tags].set(start_t),
                jnp.full((kp,), self.NEG, jnp.float32).at[:k_tags].set(end_t),
                jnp.full((kp, kp), self.NEG,
                         jnp.float32).at[:k_tags, :k_tags].set(trans),
            )
        self.heads_p = (jnp.concatenate(head_wt_blocks, axis=1),
                        jnp.concatenate(head_b_blocks, axis=0).reshape(1, -1))

    # ------------------------------------------------------------------ fwd
    def forward(self, batch):
        lengths = batch['lengths_tok'].astype(jnp.int32)
        mask = batch['token_mask'].astype(jnp.float32)          # (B, T)
        x = batch['word_embs'].astype(jnp.float32)              # (B, T, D)
        B, T, D = x.shape
        TB = self.time_block
        hp, dp = self.hidden_p, self.emb_dim_p
        Bp = _round_up(B, 8)
        Tp = _round_up(T, TB)

        x_p = jnp.zeros((Bp, Tp, dp), jnp.float32).at[:B, :T, :D].set(x)
        mask_p = jnp.zeros((Bp, Tp), jnp.float32).at[:B, :T].set(mask)

        if self.finetune:
            wt, b2 = self.emb2emb_p
            x_flat = linear_tiled(x_p.reshape(Bp * Tp, dp), wt, b2)
            x_p = x_flat.reshape(Bp, Tp, dp)

        x_tm = jnp.transpose(x_p, (1, 0, 2))                    # (Tp, Bp, Dp)
        mask_tm = jnp.transpose(mask_p, (1, 0))[:, :, None]     # (Tp, Bp, 1)

        layer_in = x_tm
        for layer in range(self.num_layers):
            w_stack, b_stack = self.lstm_p[layer]
            layer_in = lstm_layer(layer_in, mask_tm, w_stack, b_stack,
                                  hp=hp, tb=TB)
        lstm_out_tm = layer_in                                  # (Tp, Bp, nd*Hp)

        # one fused matmul for all task heads
        heads_wt, heads_b = self.heads_p
        n_rows = Tp * Bp
        dense_all = linear_tiled(lstm_out_tm.reshape(n_rows, -1),
                                 heads_wt, heads_b)
        dense_all = dense_all.reshape(Tp, Bp, -1)               # (Tp, Bp, sumKp)

        tasks_loss, tasks_preds = {}, {}
        off = 0
        for task in self.tasks:
            k = self.task_num_tags[task]
            kp = self.task_num_tags_p[task]
            dense_tm_p = dense_all[:, :, off:off + kp]          # (Tp, Bp, Kp)
            off += kp

            start_r, end_r, trans_r = self.crf_params[task]
            start_p, end_p, trans_p = self.crf_params_p[task]

            logz = crf_log_normalizer(dense_tm_p, mask_tm, trans_p,
                                      start_p, end_p, tb=TB)[:B]

            dense_bt = jnp.transpose(dense_tm_p[:T, :B, :k], (1, 0, 2))  # (B,T,K)
            num = crf_sequence_score(dense_bt, batch[task].astype(jnp.int32),
                                     mask, trans_r, start_r, end_r, lengths)
            llh = num - logz
            tasks_loss[task] = -jnp.mean(llh)                   # reduction='mean'
            preds = crf_viterbi_decode(dense_bt, mask, trans_r, start_r,
                                       end_r, lengths)
            # zero_pad(): returned at static width T (no host sync); padded
            # positions past each length are 0, matching the reference values.
            tasks_preds[task] = preds
        return {'loss': tasks_loss, 'preds': tasks_preds, 'probs': {}}


# ---------------------------------- main -------------------------------------

if __name__ == "__main__":
    key = jax.random.PRNGKey(0)
    B, T, D, H = 2, 8, 32, 32
    task2labels = {'seg': ['O', 'B', 'I'], 'label': ['A', 'B', 'C', 'D']}
    hyper = {'optimizer': 'adam', 'lr': 1e-3, 'hidden_dim': H,
             'num_layers': 1, 'bidir': True, 'fine_tune_embs': True}
    feature2dim = {'word_embs': D}

    k_model, k_x, k_t1, k_t2 = jax.random.split(key, 4)
    model = LSTMCRFPallas(hyper, task2labels, feature2dim, k_model)

    lengths = jnp.array([8, 5], dtype=jnp.int32)
    token_mask = (jnp.arange(T)[None, :] < lengths[:, None]).astype(jnp.float32)
    batch = {
        'lengths_tok': lengths,
        'token_mask': token_mask,
        'word_embs': jax.random.normal(k_x, (B, T, D), jnp.float32),
        'seg': jax.random.randint(k_t1, (B, T), 0, 3).astype(jnp.int32),
        'label': jax.random.randint(k_t2, (B, T), 0, 4).astype(jnp.int32),
    }

    out = model.forward(batch)
    jax.block_until_ready(out)
    print("KERNEL_OK")
</pallas_src>

<mosaic_0001>
module attributes {stable_mosaic.version = 11 : i64} {
  func.func @_linear_kernel(%arg0: i32, %arg1: memref<64x128xf32, #tpu.memory_space<vmem>>, %arg2: memref<128x128xf32, #tpu.memory_space<vmem>>, %arg3: memref<1x128xf32, #tpu.memory_space<vmem>>, %arg4: memref<64x128xf32, #tpu.memory_space<vmem>>) attributes {dimension_semantics = [#tpu.dimension_semantics<parallel>], iteration_bounds = array<i64: 1>, scalar_prefetch = 0 : i64, scratch_operands = 0 : i64, tpu.core_type = #tpu.core_type<tc>, window_params = [{transform_indices = @transform_0, window_bounds = array<i64: 64, 128>}, {pipeline_mode = #tpu.pipeline_mode<synchronous>, transform_indices = @transform_1, window_bounds = array<i64: 128, 128>}, {pipeline_mode = #tpu.pipeline_mode<synchronous>, transform_indices = @transform_2, window_bounds = array<i64: 1, 128>}, {transform_indices = @transform_3, window_bounds = array<i64: 64, 128>}]} {
    %c0 = arith.constant 0 : index
    %c0_0 = arith.constant 0 : index
    %0 = vector.load %arg1[%c0, %c0_0] : memref<64x128xf32, #tpu.memory_space<vmem>>, vector<64x128xf32>
    %c0_1 = arith.constant 0 : index
    %c0_2 = arith.constant 0 : index
    %1 = vector.load %arg2[%c0_1, %c0_2] : memref<128x128xf32, #tpu.memory_space<vmem>>, vector<128x128xf32>
    %cst = arith.constant dense<0.000000e+00> : vector<64x128xf32>
    %2 = tpu.matmul %0, %1, %cst {dimension_numbers = #tpu.dot_dimension_numbers<[1], [0], [0], [1], [0, 0, 1, 1], [], []>} : vector<64x128xf32>, vector<128x128xf32>, vector<64x128xf32> -> vector<64x128xf32>
    %c0_3 = arith.constant 0 : index
    %c0_4 = arith.constant 0 : index
    %3 = vector.load %arg3[%c0_3, %c0_4] : memref<1x128xf32, #tpu.memory_space<vmem>>, vector<1x128xf32>
    %4 = vector.broadcast %3 : vector<1x128xf32> to vector<64x128xf32>
    %5 = arith.addf %2, %4 : vector<64x128xf32>
    %c0_5 = arith.constant 0 : index
    %c0_6 = arith.constant 0 : index
    %6 = vector.load %arg4[%c0_5, %c0_6] : memref<64x128xf32, #tpu.memory_space<vmem>>, vector<64x128xf32>
    tpu.vector_store %arg4[%c0_5, %c0_6], %5 {strides = array<i32>} : memref<64x128xf32, #tpu.memory_space<vmem>>, vector<64x128xf32>,
    return
  }
  func.func @transform_0(%arg0: i32) -> (i32, i32) {
    %c0_i32 = arith.constant 0 : i32
    %c0_i32_0 = arith.constant 0 : i32
    return %arg0, %c0_i32 : i32, i32
  }
  func.func @transform_1(%arg0: i32) -> (i32, i32) {
    %c0_i32 = arith.constant 0 : i32
    %c0_i32_0 = arith.constant 0 : i32
    %c0_i32_1 = arith.constant 0 : i32
    return %c0_i32, %c0_i32_0 : i32, i32
  }
  func.func @transform_2(%arg0: i32) -> (i32, i32) {
    %c0_i32 = arith.constant 0 : i32
    %c0_i32_0 = arith.constant 0 : i32
    %c0_i32_1 = arith.constant 0 : i32
    return %c0_i32, %c0_i32_0 : i32, i32
  }
  func.func @transform_3(%arg0: i32) -> (i32, i32) {
    %c0_i32 = arith.constant 0 : i32
    %c0_i32_0 = arith.constant 0 : i32
    return %arg0, %c0_i32 : i32, i32
  }
}

</mosaic_0001>

<llo_original>
// kernel: tpu_custom_call.1
$region0: #{tpu_custom_call.1}
  #allocation0 [shape = 'u32[]', space=smem, size = 0x4, offset = 0x4, fixed_abs, tag = 'smem constant byte address 0x4 - core index']
  #allocation1 [shape = 'u32[144,128]{1,0:T(1,128)}', space=vmem, size = 0x12000, scoped, tag = 'internal scratch']
  %s0 = inlined_call_operand.hbm [shape: f32[64,128], index: 0, kind: input, shape index: {}]
  %s1 = inlined_call_operand.hbm [shape: f32[128,128], index: 1, kind: input, shape index: {}]
  %s2 = inlined_call_operand.vmem [shape: f32[1,128], index: 2, kind: input, shape index: {}]
  %s3 = inlined_call_operand.hbm [shape: f32[64,128], index: 3, kind: output, shape index: {}]
  %s4 = sld [smem:[#allocation0]]
  $region30: #{tpu_custom_call.1} parent=0
    _
  %s6 = ssub.s32 1, %s4
  %s7 = scalar_select 0, %s6, %s4
  $region1: #{tpu_custom_call.1} parent=0
    #allocation2 [shape = 'u8[32768]{0}', space=vmem, size = 0x8000, scoped, tag = 'input window, operand 0, single buffered']
    #allocation3 [shape = 's32[1]{0}', space=sflag, size = 0x4, scoped, tag = 'scoped memory for tpu_custom_call.1']
    #allocation4 [shape = 's32[1]{0}', space=sflag, size = 0x4, scoped, tag = 'scoped memory for tpu_custom_call.1']
    #allocation5 [shape = 'u8[65536]{0}', space=vmem, size = 0x10000, scoped, tag = 'input window, operand 1, single buffered']
    #allocation6 [shape = 's32[1]{0}', space=sflag, size = 0x4, scoped, tag = 'scoped memory for tpu_custom_call.1']
    #allocation7 [shape = 'u8[32768]{0}', space=vmem, size = 0x8000, scoped, tag = 'output window, operand 0, single buffered']
    %8 = vsyncpa [#allocation3], 0
    %9 = vsyncpa [#allocation6], 0
    %10 = vsyncpa [#allocation4], 0
    // Predicated region
    $region2: #{tpu_custom_call.1} parent=1 // pred_check
      _
    $region3: #{tpu_custom_call.1} parent=1 // pred_check_branch
      %12 = sbr.rel (0) target = $region5
    $region4: #{tpu_custom_call.1} parent=1 // pred_region
      %s14 = ssub.s32 1024, 1024
      %15 = vsyncadd [#allocation3], %s14
      %s16 = sshll.u32 [#allocation2], 4
      %s17 = int_to_ptr.vmem [resolvable:$true] %s16
      %22 = dma.hbm_to_vmem [thread:$0]  %s0, 1024, %s17, [#allocation3], 128, 128, 8
    $region5: #{tpu_custom_call.1} parent=1 // pred_fallthru
      _
    // Predicated region
    $region6: #{tpu_custom_call.1} parent=1 // pred_check
      _
    $region7: #{tpu_custom_call.1} parent=1 // pred_check_branch
      %24 = sbr.rel (0) target = $region9
    $region8: #{tpu_custom_call.1} parent=1 // pred_region
      %s26 = ssub.s32 2048, 2048
      %27 = vsyncadd [#allocation6], %s26
      %s28 = sshll.u32 [#allocation5], 4
      %s29 = int_to_ptr.vmem [resolvable:$true] %s28
      %34 = dma.hbm_to_vmem [thread:$0]  %s1, 2048, %s29, [#allocation6], 128, 128, 8
    $region9: #{tpu_custom_call.1} parent=1 // pred_fallthru
      _
    // Predicated region
    $region10: #{tpu_custom_call.1} parent=1 // pred_check
      _
    $region11: #{tpu_custom_call.1} parent=1 // pred_check_branch
      %36 = sbr.rel (0) target = $region13
    $region12: #{tpu_custom_call.1} parent=1 // pred_region
      _
    $region13: #{tpu_custom_call.1} parent=1 // pred_fallthru
      _
    // Predicated region
    $region14: #{tpu_custom_call.1} parent=1 // pred_check
      _
    $region15: #{tpu_custom_call.1} parent=1 // pred_check_branch
      %38 = sbr.rel (0) target = $region17
    $region16: #{tpu_custom_call.1} parent=1 // pred_region
      %39 = dma.done [#allocation3], 1024
    $region17: #{tpu_custom_call.1} parent=1 // pred_fallthru
      _
    // Predicated region
    $region18: #{tpu_custom_call.1} parent=1 // pred_check
      _
    $region19: #{tpu_custom_call.1} parent=1 // pred_check_branch
      %41 = sbr.rel (0) target = $region21
    $region20: #{tpu_custom_call.1} parent=1 // pred_region
      %42 = dma.done [#allocation6], 2048
    $region21: #{tpu_custom_call.1} parent=1 // pred_fallthru
      _
    %v43 = vld [vmem:[#allocation2] sm:$0xff]
    %v44 = vld [vmem:[#allocation2 + $0x8] sm:$0xff]
    %v45 = vld [vmem:[#allocation2 + $0x10] sm:$0xff]
    %v46 = vld [vmem:[#allocation2 + $0x18] sm:$0xff]
    %v47 = vld [vmem:[#allocation2 + $0x20] sm:$0xff]
    %v48 = vld [vmem:[#allocation2 + $0x28] sm:$0xff]
    %v49 = vld [vmem:[#allocation2 + $0x30] sm:$0xff]
    %v50 = vld [vmem:[#allocation2 + $0x38] sm:$0xff]
    %v51 = vld [vmem:[#allocation5] sm:$0xff]
    %v52 = vld [vmem:[#allocation5 + $0x8] sm:$0xff]
    %v53 = vld [vmem:[#allocation5 + $0x10] sm:$0xff]
    %v54 = vld [vmem:[#allocation5 + $0x18] sm:$0xff]
    %v55 = vld [vmem:[#allocation5 + $0x20] sm:$0xff]
    %v56 = vld [vmem:[#allocation5 + $0x28] sm:$0xff]
    %v57 = vld [vmem:[#allocation5 + $0x30] sm:$0xff]
    %v58 = vld [vmem:[#allocation5 + $0x38] sm:$0xff]
    %v59 = vld [vmem:[#allocation5 + $0x40] sm:$0xff]
    %v60 = vld [vmem:[#allocation5 + $0x48] sm:$0xff]
    %v61 = vld [vmem:[#allocation5 + $0x50] sm:$0xff]
    %v62 = vld [vmem:[#allocation5 + $0x58] sm:$0xff]
    %v63 = vld [vmem:[#allocation5 + $0x60] sm:$0xff]
    %v64 = vld [vmem:[#allocation5 + $0x68] sm:$0xff]
    %v65 = vld [vmem:[#allocation5 + $0x70] sm:$0xff]
    %v66 = vld [vmem:[#allocation5 + $0x78] sm:$0xff]
    %v67 = vld [vmem:[%s2] sm:$0x1]
    %v69 = vlaneseq
    %v70 = vshrl.u32 %v69, 7
    %v71 = vsub.s32 0, %v70
    %v72 = vrot.slane %v67, %v71
    %74 = vmatprep.subr.mxu0 0.0
    %75 = vmatpush1.msra.mxu0 %v51
    %76 = vmatprep.subr.mxu0 0.0
    %77 = vmatpush1.msra.mxu0 %v52
    %78 = vmatprep.subr.mxu0 0.0
    %79 = vmatpush1.msra.mxu0 %v53
    %80 = vmatprep.subr.mxu0 0.0
    %81 = vmatpush1.msra.mxu0 %v54
    %82 = vmatprep.subr.mxu0 0.0
    %83 = vmatpush1.msra.mxu0 %v55
    %84 = vmatprep.subr.mxu0 0.0
    %85 = vmatpush1.msra.mxu0 %v56
    %86 = vmatprep.subr.mxu0 0.0
    %87 = vmatpush1.msra.mxu0 %v57
    %88 = vmatprep.subr.mxu0 0.0
    %89 = vmatpush1.msra.mxu0 %v58
    %90 = vmatprep.subr.mxu0 0.0
    %91 = vmatpush1.msra.mxu0 %v59
    %92 = vmatprep.subr.mxu0 0.0
    %93 = vmatpush1.msra.mxu0 %v60
    %94 = vmatprep.subr.mxu0 0.0
    %95 = vmatpush1.msra.mxu0 %v61
    %96 = vmatprep.subr.mxu0 0.0
    %97 = vmatpush1.msra.mxu0 %v62
    %98 = vmatprep.subr.mxu0 0.0
    %99 = vmatpush1.msra.mxu0 %v63
    %100 = vmatprep.subr.mxu0 0.0
    %101 = vmatpush1.msra.mxu0 %v64
    %102 = vmatprep.subr.mxu0 0.0
    %103 = vmatpush1.msra.mxu0 %v65
    %104 = vmatprep.subr.mxu0 0.0
    %105 = vmatpush1.msra.mxu0 %v66
    %106 = vmatprep.subr.mxu0 0.0
    %107 = vmatpush1.msra.mxu0 0.0
    %108 = vmatprep.subr.mxu0 0.0
    %109 = vmatpush1.msra.mxu0 0.0
    %110 = vmatprep.subr.mxu0 0.0
    %111 = vmatpush1.msra.mxu0 0.0
    %112 = vmatprep.subr.mxu0 0.0
    %113 = vmatpush1.msra.mxu0 0.0
    %114 = vmatprep.subr.mxu0 0.0
    %115 = vmatpush1.msra.mxu0 0.0
    %116 = vmatprep.subr.mxu0 0.0
    %117 = vmatpush1.msra.mxu0 0.0
    %118 = vmatprep.subr.mxu0 0.0
    %119 = vmatpush1.msra.mxu0 0.0
    %120 = vmatprep.subr.mxu0 0.0
    %121 = vmatpush1.msra.mxu0 0.0
    %122 = vmatprep.subr.mxu0 0.0
    %123 = vmatpush1.msra.mxu0 0.0
    %124 = vmatprep.subr.mxu0 0.0
    %125 = vmatpush1.msra.mxu0 0.0
    %126 = vmatprep.subr.mxu0 0.0
    %127 = vmatpush1.msra.mxu0 0.0
    %128 = vmatprep.subr.mxu0 0.0
    %129 = vmatpush1.msra.mxu0 0.0
    %130 = vmatprep.subr.mxu0 0.0
    %131 = vmatpush1.msra.mxu0 0.0
    %132 = vmatprep.subr.mxu0 0.0
    %133 = vmatpush1.msra.mxu0 0.0
    %134 = vmatprep.subr.mxu0 0.0
    %135 = vmatpush1.msra.mxu0 0.0
    %136 = vmatprep.subr.mxu0 0.0
    %137 = vmatpush1.msra.mxu0 0.0
    %138 = vmatprep.mubr.f32.mxu0 0.0
    %139 = vmatmul.mubr.f32.gmra.mrb[0].mxu0 %v43
    %v140 = vpop.f32.mrb[0].mxu0
    %v141 = vadd.f32 %v72, %v140
    %v142 = vpop.f32.mrb[0].mxu0
    %143 = vmatprep.mubr.f32.mxu0 0.0
    %144 = vmatmul.mubr.f32.gmra.mrb[0].mxu0 %v44
    %v145 = vpop.f32.mrb[0].mxu0
    %v146 = vadd.f32 %v72, %v145
    %v147 = vpop.f32.mrb[0].mxu0
    %148 = vmatprep.mubr.f32.mxu0 0.0
    %149 = vmatmul.mubr.f32.gmra.mrb[0].mxu0 %v45
    %v150 = vpop.f32.mrb[0].mxu0
    %v151 = vadd.f32 %v72, %v150
    %v152 = vpop.f32.mrb[0].mxu0
    %153 = vmatprep.mubr.f32.mxu0 0.0
    %154 = vmatmul.mubr.f32.gmra.mrb[0].mxu0 %v46
    %v155 = vpop.f32.mrb[0].mxu0
    %v156 = vadd.f32 %v72, %v155
    %v157 = vpop.f32.mrb[0].mxu0
    %158 = vmatprep.mubr.f32.mxu0 0.0
    %159 = vmatmul.mubr.f32.gmra.mrb[0].mxu0 %v47
    %v160 = vpop.f32.mrb[0].mxu0
    %v161 = vadd.f32 %v72, %v160
    %v162 = vpop.f32.mrb[0].mxu0
    %163 = vmatprep.mubr.f32.mxu0 0.0
    %164 = vmatmul.mubr.f32.gmra.mrb[0].mxu0 %v48
    %v165 = vpop.f32.mrb[0].mxu0
    %v166 = vadd.f32 %v72, %v165
    %v167 = vpop.f32.mrb[0].mxu0
    %168 = vmatprep.mubr.f32.mxu0 0.0
    %169 = vmatmul.mubr.f32.gmra.mrb[0].mxu0 %v49
    %v170 = vpop.f32.mrb[0].mxu0
    %v171 = vadd.f32 %v72, %v170
    %v172 = vpop.f32.mrb[0].mxu0
    %173 = vmatprep.mubr.f32.mxu0 0.0
    %174 = vmatmul.mubr.f32.gmra.mrb[0].mxu0 %v50
    %v175 = vpop.f32.mrb[0].mxu0
    %v176 = vadd.f32 %v72, %v175
    %v177 = vpop.f32.mrb[0].mxu0
    %178 = vdwg.mxu0
    %179 = vst [vmem:[#allocation7] sm:$0xff] %v141
    %180 = vst [vmem:[#allocation7 + $0x8] sm:$0xff] %v146
    %181 = vst [vmem:[#allocation7 + $0x10] sm:$0xff] %v151
    %182 = vst [vmem:[#allocation7 + $0x18] sm:$0xff] %v156
    %183 = vst [vmem:[#allocation7 + $0x20] sm:$0xff] %v161
    %184 = vst [vmem:[#allocation7 + $0x28] sm:$0xff] %v166
    %185 = vst [vmem:[#allocation7 + $0x30] sm:$0xff] %v171
    %186 = vst [vmem:[#allocation7 + $0x38] sm:$0xff] %v176
    // Predicated region
    $region22: #{tpu_custom_call.1} parent=1 // pred_check
      _
    $region23: #{tpu_custom_call.1} parent=1 // pred_check_branch
      %188 = sbr.rel (0) target = $region25
    $region24: #{tpu_custom_call.1} parent=1 // pred_region
      %s190 = ssub.s32 1024, 1024
      %191 = vsyncadd [#allocation4], %s190
      %s192 = sshll.u32 [#allocation7], 4
      %s193 = int_to_ptr.vmem [resolvable:$true] %s192
      %198 = dma.vmem_to_hbm [thread:$0]  %s193, 1024, %s3, [#allocation4], 128, 128, 8
    $region25: #{tpu_custom_call.1} parent=1 // pred_fallthru
      _
    // Predicated region
    $region26: #{tpu_custom_call.1} parent=1 // pred_check
      _
    $region27: #{tpu_custom_call.1} parent=1 // pred_check_branch
      %200 = sbr.rel (0) target = $region29
    $region28: #{tpu_custom_call.1} parent=1 // pred_region
      %201 = dma.done [#allocation4], 1024
    $region29: #{tpu_custom_call.1} parent=1 // pred_fallthru
      _
    %202 = vsyncpa [#allocation3], 1
    %203 = vsyncpa [#allocation6], 1
    %204 = vsyncpa [#allocation4], 1

</llo_original>
